<compile_context>
chip_gen: v5e
topology: v5e:2x2
jax: 0.10.0
libtpu: 0.0.40
codegen_flags: <defaults>
</compile_context>

<pallas_src>
import functools

import jax
import jax.numpy as jnp
from jax.experimental import pallas as pl
from jax.experimental.pallas import tpu as pltpu


def _cdiv(a, b):
    return (a + b - 1) // b


def _round_up(n, m):
    return ((n + m - 1) // m) * m


# -----------------------------------------------------------------------------
# Pallas kernel: fused (x + temb) -> 1x1 conv (VPU-unrolled) -> bias -> SiLU
# -----------------------------------------------------------------------------
def _conv1x1_time_silu_kernel(t_ref, w_ref, b_ref, x_ref, o_ref,
                              *, b_tile, cin, cout):
    # t_ref: (B*cin,)    f32 SMEM (scalar prefetch) per-batch timestep embedding
    # w_ref: (cin*cout,) f32 SMEM                    1x1-conv weight, w[ci*cout+co]
    # b_ref: (cout,)     f32 SMEM                    conv bias
    # x_ref: (b_tile, cin, r_tile, 128)  VMEM        dense pixel tile
    # o_ref: (b_tile, cout, r_tile, 128) VMEM        dense output tile
    b0 = pl.program_id(0) * b_tile
    for bb in range(b_tile):
        # Broadcast-add the per-(batch, channel) timestep scalar once; all
        # vector work afterwards runs on dense (r_tile, 128) vregs.
        xt = [x_ref[bb, ci].astype(jnp.float32) + t_ref[(b0 + bb) * cin + ci]
              for ci in range(cin)]
        # Tiny contraction (cin, cout <= 16): statically unrolled VPU FMAs with
        # SMEM-scalar weights -- a 4x4 matmul would waste the 128/256-wide MXU.
        for co in range(cout):
            acc = xt[0] * w_ref[co]
            for ci in range(1, cin):
                acc = acc + xt[ci] * w_ref[ci * cout + co]
            acc = acc + b_ref[co]
            o_ref[bb, co] = (acc * jax.nn.sigmoid(acc)).astype(o_ref.dtype)  # SiLU


def conv1x1_time_silu(x_nchw, temb_bc, w_io, b_o, *, target_step_bytes=4 << 20):
    """out[b,o,h,w] = SiLU(sum_c w[c,o] * (x[b,c,h,w] + temb[b,c]) + b[o])."""
    B, cin, H, W = x_nchw.shape
    cin_w, cout = w_io.shape
    assert cin == cin_w and temb_bc.shape == (B, cin)
    # VPU-unrolled contraction is only the right structure for tiny channels;
    # past cin~16 the kernel flips VALU-bound.
    # TODO(synk): for wide models (cin/cout >= 32) switch to a channels-last MXU
    # matmul with a K grid axis + f32 VMEM accumulator.
    assert cin <= 16 and cout <= 16, "VPU-unrolled kernel targets small channels"

    lane = 128
    hw = H * W
    itemsize = jnp.dtype(x_nchw.dtype).itemsize
    out_dtype = x_nchw.dtype
    # TODO(synk): if the surrounding model tolerates bf16 I/O, cast x/out to
    # bf16 here to halve HBM traffic (in-kernel accumulation stays f32).

    # --- pixel (row) tiling: dense (r_tile, 128) tiles, balanced sizes --------
    R = _cdiv(hw, lane)                              # rows of 128 pixels / batch
    row_bytes = cin * lane * itemsize
    max_rows = max(8, target_step_bytes // row_bytes)
    n_rtiles = _cdiv(R, max_rows)
    if B == 1 and n_rtiles == 1 and R > 8:
        n_rtiles = 2          # keep >=2 parallel grid steps (v7x megacore)
    if n_rtiles == 1:
        r_tile = R            # block == full dim -> no sublane padding in HBM
    else:
        r_tile = _round_up(_cdiv(R, n_rtiles), 8)    # balanced, sublane-aligned
        n_rtiles = _cdiv(R, r_tile)
    R_pad = r_tile * n_rtiles
    hw_pad = R_pad * lane

    # --- batch tiling: fold small images, keep >=2 steps for megacore ---------
    if n_rtiles >= 2:
        b_tile = 1
    else:
        per_batch = cin * r_tile * lane * itemsize
        b_tile = int(max(1, min(B, target_step_bytes // max(per_batch, 1))))
        if B >= 2:
            b_tile = min(b_tile, max(1, B // 2))     # >=2 parallel grid steps
        b_tile = min(b_tile, 16)                     # cap static unroll size
        while B % b_tile:
            b_tile -= 1
    n_btiles = B // b_tile

    # --- relayout to lane-dense (B, cin, R_pad, 128) ---------------------------
    # TODO(synk): when W % 128 == 0 this reshape is layout-preserving; otherwise
    # it is a single relayout pass that buys dense lane/sublane kernel tiles.
    x_flat = x_nchw.reshape(B, cin, hw)
    if hw_pad != hw:
        x_flat = jnp.pad(x_flat, ((0, 0), (0, 0), (0, hw_pad - hw)))
    x_k = x_flat.reshape(B, cin, R_pad, lane)

    # Tiny per-batch / per-channel scalars -> SMEM via scalar prefetch.
    t_sm = temb_bc.reshape(-1).astype(jnp.float32)       # (B*cin,)
    w_sm = w_io.reshape(-1).astype(jnp.float32)          # (cin*cout,)
    b_sm = b_o.reshape(-1).astype(jnp.float32)           # (cout,)

    kernel = functools.partial(_conv1x1_time_silu_kernel,
                               b_tile=b_tile, cin=cin, cout=cout)

    # VMEM budget: double-buffered x/out tiles + tiny headroom.  Keep <=32 MiB
    # so the same tiling fits v7x's 64 MiB/TC; v5e/v6e (128 MiB) have slack.
    x_block = b_tile * cin * r_tile * lane * itemsize
    o_block = b_tile * cout * r_tile * lane * jnp.dtype(out_dtype).itemsize
    vmem_need = 2 * (x_block + o_block)
    vmem_limit = int(min(max(vmem_need + (2 << 20), 16 << 20), 32 << 20))

    out = pl.pallas_call(
        kernel,
        out_shape=jax.ShapeDtypeStruct((B, cout, R_pad, lane), out_dtype),
        grid_spec=pltpu.PrefetchScalarGridSpec(
            num_scalar_prefetch=3,
            grid=(n_btiles, n_rtiles),
            in_specs=[
                pl.BlockSpec((b_tile, cin, r_tile, lane),
                             lambda bi, ri, *_: (bi, 0, ri, 0)),
            ],
            out_specs=pl.BlockSpec((b_tile, cout, r_tile, lane),
                                   lambda bi, ri, *_: (bi, 0, ri, 0)),
        ),
        compiler_params=pltpu.CompilerParams(
            dimension_semantics=("parallel", "parallel"),
            vmem_limit_bytes=vmem_limit,
        ),
    )(t_sm, w_sm, b_sm, x_k)

    out = out.reshape(B, cout, hw_pad)
    if hw_pad != hw:
        out = out[:, :, :hw]
    return out.reshape(B, cout, H, W)


# -----------------------------------------------------------------------------
# Glue: timestep embedding (tiny, plain JAX) + top-level forward
# -----------------------------------------------------------------------------
def sinusoidal_embedding(timesteps, dim):
    # timesteps: (B,) -> (B, dim) float32 sinusoidal embedding (odd dim padded).
    half = dim // 2
    freqs = jnp.exp(-jnp.log(10000.0) * jnp.arange(half, dtype=jnp.float32) / half)
    args = timesteps.astype(jnp.float32)[:, None] * freqs[None, :]
    emb = jnp.concatenate([jnp.sin(args), jnp.cos(args)], axis=-1)
    if dim % 2 == 1:
        emb = jnp.pad(emb, ((0, 0), (0, 1)))
    return emb


def init_params(key, c_in, c_out, emb_dim):
    k1, k2, k3, k4 = jax.random.split(key, 4)
    return {
        # timestep-embedding projection: (emb_dim,) -> (c_in,)
        "w_t": jax.random.normal(k1, (emb_dim, c_in), jnp.float32) * 0.02,
        "b_t": jax.random.normal(k2, (c_in,), jnp.float32) * 0.02,
        # 1x1 conv: c_in -> c_out (stored as (Cin, Cout))
        "w_conv": jax.random.normal(k3, (c_in, c_out), jnp.float32) * 0.1,
        "b_conv": jax.random.normal(k4, (c_out,), jnp.float32) * 0.1,
    }


@functools.partial(jax.jit, static_argnames=("emb_dim",))
def wrapped_model_forward(x_nchw, timesteps, params, *, emb_dim=32):
    """Equivalent of WrappedModel.forward: model(x, self.timesteps)."""
    # Tiny timestep-embedding projection (glue) -> (B, C); NOT broadcast to pixels.
    temb = sinusoidal_embedding(timesteps, emb_dim)
    temb_c = temb @ params["w_t"] + params["b_t"]
    return conv1x1_time_silu(x_nchw, temb_c, params["w_conv"], params["b_conv"])


def _reference_forward(x_nchw, timesteps, params, emb_dim):
    temb = sinusoidal_embedding(timesteps, emb_dim)
    temb_c = temb @ params["w_t"] + params["b_t"]
    h = x_nchw + temb_c[:, :, None, None]
    out = jnp.einsum("co,bchw->bohw", params["w_conv"], h,
                     precision=jax.lax.Precision.HIGHEST)
    out = out + params["b_conv"][None, :, None, None]
    return out * jax.nn.sigmoid(out)


if __name__ == "__main__":
    key = jax.random.PRNGKey(0)
    k_x, k_p = jax.random.split(key)

    B, C, H, W = 2, 4, 16, 16
    EMB = 32
    COUT = 4

    x = jax.random.normal(k_x, (B, C, H, W), jnp.float32)
    timesteps = jnp.full((B,), 7, dtype=jnp.int32)  # fixed, as in __init__
    params = init_params(k_p, C, COUT, EMB)

    out = wrapped_model_forward(x, timesteps, params, emb_dim=EMB)
    out = jax.block_until_ready(out)

    ref = jax.block_until_ready(_reference_forward(x, timesteps, params, EMB))

    assert out.shape == (B, COUT, H, W), out.shape
    assert bool(jnp.all(jnp.isfinite(out)))
    err = float(jnp.max(jnp.abs(out - ref)))
    assert err < 1e-4, f"max abs error vs reference: {err}"
    print("KERNEL_OK")
</pallas_src>

<mosaic_0001>
module attributes {stable_mosaic.version = 11 : i64} {
  func.func @_conv1x1_time_silu_kernel(%arg0: i32, %arg1: i32, %arg2: memref<8xf32, #tpu.memory_space<smem>>, %arg3: memref<16xf32, #tpu.memory_space<smem>>, %arg4: memref<4xf32, #tpu.memory_space<smem>>, %arg5: memref<1x4x2x128xf32, #tpu.memory_space<vmem>>, %arg6: memref<1x4x2x128xf32, #tpu.memory_space<vmem>>) attributes {dimension_semantics = [#tpu.dimension_semantics<parallel>, #tpu.dimension_semantics<parallel>], iteration_bounds = array<i64: 2, 1>, scalar_prefetch = 3 : i64, scratch_operands = 0 : i64, tpu.core_type = #tpu.core_type<tc>, window_params = [{transform_indices = @transform_0, window_bounds = array<i64: 1, 4, 2, 128>}, {transform_indices = @transform_1, window_bounds = array<i64: 1, 4, 2, 128>}]} {
    %c1_i32 = arith.constant 1 : i32
    %0 = arith.muli %arg0, %c1_i32 : i32
    %c0 = arith.constant 0 : index
    %c0_0 = arith.constant 0 : index
    %c0_1 = arith.constant 0 : index
    %c0_2 = arith.constant 0 : index
    %1 = vector.load %arg5[%c0, %c0_0, %c0_1, %c0_2] : memref<1x4x2x128xf32, #tpu.memory_space<vmem>>, vector<1x1x2x128xf32>
    %2 = vector.shape_cast %1 : vector<1x1x2x128xf32> to vector<2x128xf32>
    %c0_i32 = arith.constant 0 : i32
    %3 = arith.addi %0, %c0_i32 : i32
    %c4_i32 = arith.constant 4 : i32
    %4 = arith.muli %3, %c4_i32 : i32
    %c0_i32_3 = arith.constant 0 : i32
    %5 = arith.addi %4, %c0_i32_3 : i32
    %6 = arith.index_cast %5 : i32 to index
    %7 = memref.load %arg2[%6] : memref<8xf32, #tpu.memory_space<smem>>
    %8 = vector.broadcast %7 : f32 to vector<2x128xf32>
    %9 = arith.addf %2, %8 : vector<2x128xf32>
    %c0_4 = arith.constant 0 : index
    %c1 = arith.constant 1 : index
    %c0_5 = arith.constant 0 : index
    %c0_6 = arith.constant 0 : index
    %10 = vector.load %arg5[%c0_4, %c1, %c0_5, %c0_6] : memref<1x4x2x128xf32, #tpu.memory_space<vmem>>, vector<1x1x2x128xf32>
    %11 = vector.shape_cast %10 : vector<1x1x2x128xf32> to vector<2x128xf32>
    %c0_i32_7 = arith.constant 0 : i32
    %12 = arith.addi %0, %c0_i32_7 : i32
    %c4_i32_8 = arith.constant 4 : i32
    %13 = arith.muli %12, %c4_i32_8 : i32
    %c1_i32_9 = arith.constant 1 : i32
    %14 = arith.addi %13, %c1_i32_9 : i32
    %15 = arith.index_cast %14 : i32 to index
    %16 = memref.load %arg2[%15] : memref<8xf32, #tpu.memory_space<smem>>
    %17 = vector.broadcast %16 : f32 to vector<2x128xf32>
    %18 = arith.addf %11, %17 : vector<2x128xf32>
    %c0_10 = arith.constant 0 : index
    %c2 = arith.constant 2 : index
    %c0_11 = arith.constant 0 : index
    %c0_12 = arith.constant 0 : index
    %19 = vector.load %arg5[%c0_10, %c2, %c0_11, %c0_12] : memref<1x4x2x128xf32, #tpu.memory_space<vmem>>, vector<1x1x2x128xf32>
    %20 = vector.shape_cast %19 : vector<1x1x2x128xf32> to vector<2x128xf32>
    %c0_i32_13 = arith.constant 0 : i32
    %21 = arith.addi %0, %c0_i32_13 : i32
    %c4_i32_14 = arith.constant 4 : i32
    %22 = arith.muli %21, %c4_i32_14 : i32
    %c2_i32 = arith.constant 2 : i32
    %23 = arith.addi %22, %c2_i32 : i32
    %24 = arith.index_cast %23 : i32 to index
    %25 = memref.load %arg2[%24] : memref<8xf32, #tpu.memory_space<smem>>
    %26 = vector.broadcast %25 : f32 to vector<2x128xf32>
    %27 = arith.addf %20, %26 : vector<2x128xf32>
    %c0_15 = arith.constant 0 : index
    %c3 = arith.constant 3 : index
    %c0_16 = arith.constant 0 : index
    %c0_17 = arith.constant 0 : index
    %28 = vector.load %arg5[%c0_15, %c3, %c0_16, %c0_17] : memref<1x4x2x128xf32, #tpu.memory_space<vmem>>, vector<1x1x2x128xf32>
    %29 = vector.shape_cast %28 : vector<1x1x2x128xf32> to vector<2x128xf32>
    %c0_i32_18 = arith.constant 0 : i32
    %30 = arith.addi %0, %c0_i32_18 : i32
    %c4_i32_19 = arith.constant 4 : i32
    %31 = arith.muli %30, %c4_i32_19 : i32
    %c3_i32 = arith.constant 3 : i32
    %32 = arith.addi %31, %c3_i32 : i32
    %33 = arith.index_cast %32 : i32 to index
    %34 = memref.load %arg2[%33] : memref<8xf32, #tpu.memory_space<smem>>
    %35 = vector.broadcast %34 : f32 to vector<2x128xf32>
    %36 = arith.addf %29, %35 : vector<2x128xf32>
    %c0_20 = arith.constant 0 : index
    %37 = memref.load %arg3[%c0_20] : memref<16xf32, #tpu.memory_space<smem>>
    %38 = vector.broadcast %37 : f32 to vector<2x128xf32>
    %39 = arith.mulf %9, %38 : vector<2x128xf32>
    %c4 = arith.constant 4 : index
    %40 = memref.load %arg3[%c4] : memref<16xf32, #tpu.memory_space<smem>>
    %41 = vector.broadcast %40 : f32 to vector<2x128xf32>
    %42 = arith.mulf %18, %41 : vector<2x128xf32>
    %43 = arith.addf %39, %42 : vector<2x128xf32>
    %c8 = arith.constant 8 : index
    %44 = memref.load %arg3[%c8] : memref<16xf32, #tpu.memory_space<smem>>
    %45 = vector.broadcast %44 : f32 to vector<2x128xf32>
    %46 = arith.mulf %27, %45 : vector<2x128xf32>
    %47 = arith.addf %43, %46 : vector<2x128xf32>
    %c12 = arith.constant 12 : index
    %48 = memref.load %arg3[%c12] : memref<16xf32, #tpu.memory_space<smem>>
    %49 = vector.broadcast %48 : f32 to vector<2x128xf32>
    %50 = arith.mulf %36, %49 : vector<2x128xf32>
    %51 = arith.addf %47, %50 : vector<2x128xf32>
    %c0_21 = arith.constant 0 : index
    %52 = memref.load %arg4[%c0_21] : memref<4xf32, #tpu.memory_space<smem>>
    %53 = vector.broadcast %52 : f32 to vector<2x128xf32>
    %54 = arith.addf %51, %53 : vector<2x128xf32>
    %55 = arith.negf %54 : vector<2x128xf32>
    %56 = math.exp %55 : vector<2x128xf32>
    %cst = arith.constant 1.000000e+00 : f32
    %57 = vector.broadcast %cst : f32 to vector<2x128xf32>
    %58 = arith.addf %57, %56 : vector<2x128xf32>
    %59 = arith.divf %57, %58 : vector<2x128xf32>
    %60 = arith.mulf %54, %59 : vector<2x128xf32>
    %c0_22 = arith.constant 0 : index
    %c0_23 = arith.constant 0 : index
    %c0_24 = arith.constant 0 : index
    %c0_25 = arith.constant 0 : index
    %61 = vector.load %arg6[%c0_22, %c0_23, %c0_24, %c0_25] : memref<1x4x2x128xf32, #tpu.memory_space<vmem>>, vector<1x1x2x128xf32>
    %62 = vector.shape_cast %61 : vector<1x1x2x128xf32> to vector<2x128xf32>
    %63 = vector.shape_cast %60 : vector<2x128xf32> to vector<1x1x2x128xf32>
    tpu.vector_store %arg6[%c0_22, %c0_23, %c0_24, %c0_25], %63 {strides = array<i32>} : memref<1x4x2x128xf32, #tpu.memory_space<vmem>>, vector<1x1x2x128xf32>,
    %c1_26 = arith.constant 1 : index
    %64 = memref.load %arg3[%c1_26] : memref<16xf32, #tpu.memory_space<smem>>
    %65 = vector.broadcast %64 : f32 to vector<2x128xf32>
    %66 = arith.mulf %9, %65 : vector<2x128xf32>
    %c5 = arith.constant 5 : index
    %67 = memref.load %arg3[%c5] : memref<16xf32, #tpu.memory_space<smem>>
    %68 = vector.broadcast %67 : f32 to vector<2x128xf32>
    %69 = arith.mulf %18, %68 : vector<2x128xf32>
    %70 = arith.addf %66, %69 : vector<2x128xf32>
    %c9 = arith.constant 9 : index
    %71 = memref.load %arg3[%c9] : memref<16xf32, #tpu.memory_space<smem>>
    %72 = vector.broadcast %71 : f32 to vector<2x128xf32>
    %73 = arith.mulf %27, %72 : vector<2x128xf32>
    %74 = arith.addf %70, %73 : vector<2x128xf32>
    %c13 = arith.constant 13 : index
    %75 = memref.load %arg3[%c13] : memref<16xf32, #tpu.memory_space<smem>>
    %76 = vector.broadcast %75 : f32 to vector<2x128xf32>
    %77 = arith.mulf %36, %76 : vector<2x128xf32>
    %78 = arith.addf %74, %77 : vector<2x128xf32>
    %c1_27 = arith.constant 1 : index
    %79 = memref.load %arg4[%c1_27] : memref<4xf32, #tpu.memory_space<smem>>
    %80 = vector.broadcast %79 : f32 to vector<2x128xf32>
    %81 = arith.addf %78, %80 : vector<2x128xf32>
    %82 = arith.negf %81 : vector<2x128xf32>
    %83 = math.exp %82 : vector<2x128xf32>
    %cst_28 = arith.constant 1.000000e+00 : f32
    %84 = vector.broadcast %cst_28 : f32 to vector<2x128xf32>
    %85 = arith.addf %84, %83 : vector<2x128xf32>
    %86 = arith.divf %84, %85 : vector<2x128xf32>
    %87 = arith.mulf %81, %86 : vector<2x128xf32>
    %c0_29 = arith.constant 0 : index
    %c1_30 = arith.constant 1 : index
    %c0_31 = arith.constant 0 : index
    %c0_32 = arith.constant 0 : index
    %88 = vector.load %arg6[%c0_29, %c1_30, %c0_31, %c0_32] : memref<1x4x2x128xf32, #tpu.memory_space<vmem>>, vector<1x1x2x128xf32>
    %89 = vector.shape_cast %88 : vector<1x1x2x128xf32> to vector<2x128xf32>
    %90 = vector.shape_cast %87 : vector<2x128xf32> to vector<1x1x2x128xf32>
    tpu.vector_store %arg6[%c0_29, %c1_30, %c0_31, %c0_32], %90 {strides = array<i32>} : memref<1x4x2x128xf32, #tpu.memory_space<vmem>>, vector<1x1x2x128xf32>,
    %c2_33 = arith.constant 2 : index
    %91 = memref.load %arg3[%c2_33] : memref<16xf32, #tpu.memory_space<smem>>
    %92 = vector.broadcast %91 : f32 to vector<2x128xf32>
    %93 = arith.mulf %9, %92 : vector<2x128xf32>
    %c6 = arith.constant 6 : index
    %94 = memref.load %arg3[%c6] : memref<16xf32, #tpu.memory_space<smem>>
    %95 = vector.broadcast %94 : f32 to vector<2x128xf32>
    %96 = arith.mulf %18, %95 : vector<2x128xf32>
    %97 = arith.addf %93, %96 : vector<2x128xf32>
    %c10 = arith.constant 10 : index
    %98 = memref.load %arg3[%c10] : memref<16xf32, #tpu.memory_space<smem>>
    %99 = vector.broadcast %98 : f32 to vector<2x128xf32>
    %100 = arith.mulf %27, %99 : vector<2x128xf32>
    %101 = arith.addf %97, %100 : vector<2x128xf32>
    %c14 = arith.constant 14 : index
    %102 = memref.load %arg3[%c14] : memref<16xf32, #tpu.memory_space<smem>>
    %103 = vector.broadcast %102 : f32 to vector<2x128xf32>
    %104 = arith.mulf %36, %103 : vector<2x128xf32>
    %105 = arith.addf %101, %104 : vector<2x128xf32>
    %c2_34 = arith.constant 2 : index
    %106 = memref.load %arg4[%c2_34] : memref<4xf32, #tpu.memory_space<smem>>
    %107 = vector.broadcast %106 : f32 to vector<2x128xf32>
    %108 = arith.addf %105, %107 : vector<2x128xf32>
    %109 = arith.negf %108 : vector<2x128xf32>
    %110 = math.exp %109 : vector<2x128xf32>
    %cst_35 = arith.constant 1.000000e+00 : f32
    %111 = vector.broadcast %cst_35 : f32 to vector<2x128xf32>
    %112 = arith.addf %111, %110 : vector<2x128xf32>
    %113 = arith.divf %111, %112 : vector<2x128xf32>
    %114 = arith.mulf %108, %113 : vector<2x128xf32>
    %c0_36 = arith.constant 0 : index
    %c2_37 = arith.constant 2 : index
    %c0_38 = arith.constant 0 : index
    %c0_39 = arith.constant 0 : index
    %115 = vector.load %arg6[%c0_36, %c2_37, %c0_38, %c0_39] : memref<1x4x2x128xf32, #tpu.memory_space<vmem>>, vector<1x1x2x128xf32>
    %116 = vector.shape_cast %115 : vector<1x1x2x128xf32> to vector<2x128xf32>
    %117 = vector.shape_cast %114 : vector<2x128xf32> to vector<1x1x2x128xf32>
    tpu.vector_store %arg6[%c0_36, %c2_37, %c0_38, %c0_39], %117 {strides = array<i32>} : memref<1x4x2x128xf32, #tpu.memory_space<vmem>>, vector<1x1x2x128xf32>,
    %c3_40 = arith.constant 3 : index
    %118 = memref.load %arg3[%c3_40] : memref<16xf32, #tpu.memory_space<smem>>
    %119 = vector.broadcast %118 : f32 to vector<2x128xf32>
    %120 = arith.mulf %9, %119 : vector<2x128xf32>
    %c7 = arith.constant 7 : index
    %121 = memref.load %arg3[%c7] : memref<16xf32, #tpu.memory_space<smem>>
    %122 = vector.broadcast %121 : f32 to vector<2x128xf32>
    %123 = arith.mulf %18, %122 : vector<2x128xf32>
    %124 = arith.addf %120, %123 : vector<2x128xf32>
    %c11 = arith.constant 11 : index
    %125 = memref.load %arg3[%c11] : memref<16xf32, #tpu.memory_space<smem>>
    %126 = vector.broadcast %125 : f32 to vector<2x128xf32>
    %127 = arith.mulf %27, %126 : vector<2x128xf32>
    %128 = arith.addf %124, %127 : vector<2x128xf32>
    %c15 = arith.constant 15 : index
    %129 = memref.load %arg3[%c15] : memref<16xf32, #tpu.memory_space<smem>>
    %130 = vector.broadcast %129 : f32 to vector<2x128xf32>
    %131 = arith.mulf %36, %130 : vector<2x128xf32>
    %132 = arith.addf %128, %131 : vector<2x128xf32>
    %c3_41 = arith.constant 3 : index
    %133 = memref.load %arg4[%c3_41] : memref<4xf32, #tpu.memory_space<smem>>
    %134 = vector.broadcast %133 : f32 to vector<2x128xf32>
    %135 = arith.addf %132, %134 : vector<2x128xf32>
    %136 = arith.negf %135 : vector<2x128xf32>
    %137 = math.exp %136 : vector<2x128xf32>
    %cst_42 = arith.constant 1.000000e+00 : f32
    %138 = vector.broadcast %cst_42 : f32 to vector<2x128xf32>
    %139 = arith.addf %138, %137 : vector<2x128xf32>
    %140 = arith.divf %138, %139 : vector<2x128xf32>
    %141 = arith.mulf %135, %140 : vector<2x128xf32>
    %c0_43 = arith.constant 0 : index
    %c3_44 = arith.constant 3 : index
    %c0_45 = arith.constant 0 : index
    %c0_46 = arith.constant 0 : index
    %142 = vector.load %arg6[%c0_43, %c3_44, %c0_45, %c0_46] : memref<1x4x2x128xf32, #tpu.memory_space<vmem>>, vector<1x1x2x128xf32>
    %143 = vector.shape_cast %142 : vector<1x1x2x128xf32> to vector<2x128xf32>
    %144 = vector.shape_cast %141 : vector<2x128xf32> to vector<1x1x2x128xf32>
    tpu.vector_store %arg6[%c0_43, %c3_44, %c0_45, %c0_46], %144 {strides = array<i32>} : memref<1x4x2x128xf32, #tpu.memory_space<vmem>>, vector<1x1x2x128xf32>,
    return
  }
  func.func @transform_0(%arg0: i32, %arg1: i32, %arg2: memref<8xf32, #tpu.memory_space<smem>>, %arg3: memref<16xf32, #tpu.memory_space<smem>>, %arg4: memref<4xf32, #tpu.memory_space<smem>>) -> (i32, i32, i32, i32) {
    %c0_i32 = arith.constant 0 : i32
    %c0_i32_0 = arith.constant 0 : i32
    %c0_i32_1 = arith.constant 0 : i32
    return %arg0, %c0_i32, %arg1, %c0_i32_0 : i32, i32, i32, i32
  }
  func.func @transform_1(%arg0: i32, %arg1: i32, %arg2: memref<8xf32, #tpu.memory_space<smem>>, %arg3: memref<16xf32, #tpu.memory_space<smem>>, %arg4: memref<4xf32, #tpu.memory_space<smem>>) -> (i32, i32, i32, i32) {
    %c0_i32 = arith.constant 0 : i32
    %c0_i32_0 = arith.constant 0 : i32
    %c0_i32_1 = arith.constant 0 : i32
    return %arg0, %c0_i32, %arg1, %c0_i32_0 : i32, i32, i32, i32
  }
}

</mosaic_0001>

<llo_original>
// kernel: wrapped_model_forward.1
$region0: #{wrapped_model_forward.1}
  #allocation0 [shape = 'u32[]', space=smem, size = 0x4, offset = 0x4, fixed_abs, tag = 'smem constant byte address 0x4 - core index']
  #allocation1 [shape = 'u32[72,128]{1,0:T(1,128)}', space=vmem, size = 0x9000, scoped, tag = 'internal scratch']
  #allocation2 [shape = 's32[1]{0}', space=sflag, size = 0x4, scoped, tag = 'scoped memory for wrapped_model_forward.1']
  #allocation3 [shape = 'u8[512]{0}', space=smem, size = 0x200, scoped, tag = 'prefetched SMEM operand 0']
  #allocation4 [shape = 'u8[512]{0}', space=smem, size = 0x200, scoped, tag = 'prefetched SMEM operand 1']
  #allocation5 [shape = 'u8[512]{0}', space=smem, size = 0x200, scoped, tag = 'prefetched SMEM operand 2']
  %s0 = inlined_call_operand.vmem [shape: f32[8], index: 0, kind: input, shape index: {}]
  %s1 = inlined_call_operand.vmem [shape: f32[16], index: 1, kind: input, shape index: {}]
  %s2 = inlined_call_operand.vmem [shape: f32[4], index: 2, kind: input, shape index: {}]
  %s3 = inlined_call_operand.vmem [shape: f32[2,4,2,128], index: 3, kind: input, shape index: {}]
  %s4 = inlined_call_operand.vmem [shape: f32[2,4,2,128], index: 4, kind: output, shape index: {}]
  %s5 = sld [smem:[#allocation0]]
  $region37: #{wrapped_model_forward.1} parent=0
    _
  %s7 = ssub.s32 1, %s5
  %s8 = scalar_select 0, %s7, %s5
  %s10 = sshll.u32 %s0, 4
  %s11 = int_to_ptr.vmem [resolvable:$true] %s10
  %13 = dma.vmem_to_smem %s11, 16, [#allocation3], [#allocation2]
  %s15 = sshll.u32 %s1, 4
  %s16 = int_to_ptr.vmem [resolvable:$true] %s15
  %18 = dma.vmem_to_smem %s16, 16, [#allocation4], [#allocation2]
  %s20 = sshll.u32 %s2, 4
  %s21 = int_to_ptr.vmem [resolvable:$true] %s20
  %23 = dma.vmem_to_smem %s21, 16, [#allocation5], [#allocation2]
  %25 = dma.done [#allocation2], 48
  %26 = sfence
  loop: start=0, step=1, limit=4
  $region2: #{wrapped_model_forward.1} parent=0 // loop_pre_header
    _
  $region3: #{wrapped_model_forward.1} parent=0 // loop_header
    %s28 = sphi 0, %s32
    %p29 = scmp.ge.s32.totalorder %s28, 4
    %s35 = sphi 0, %s47
    %s36 = sphi 0, %s43
    %s37 = sphi 0, %s35
    %s38 = sphi 0, %s36
    %s39 = sphi 0, %s37
    %s40 = sphi 0, %s38
    %s52 = sphi 0, %s54
    %s55 = sphi 0, %s52
    %s56 = sphi 0, %s55
    %s72 = sphi 0, %s56
    %s80 = sphi 0, %s82
    %s83 = sphi 0, %s80
    %s84 = sphi 0, %s83
    %s100 = sphi 0, %s84
  $region4: #{wrapped_model_forward.1} parent=0 // loop_header_branch
    %31 = sbr.rel (%p29) target = $region8
  $region5: #{wrapped_model_forward.1} parent=0 // loop_body
    %s33 = ssub.s32 %s28, 1
    %s34 = ssub.s32 %s28, 2
    %s41 = sadd.s32 1, %s36
    %p42 = scmp.ge.s32.totalorder %s41, 1
    %s43 = scalar_select %p42, 0, %s41
    %s44 = sadd.s32 1, %s35
    %s45 = scalar_select %p42, %s44, %s35
    %p46 = scmp.ge.s32.totalorder %s45, 2
    %s47 = scalar_select %p46, 0, %s45
    %s48 = ssub.s32 %s35, %s47
    %s49 = ssub.s32 %s36, %s43
    %s50 = sor.u32 %s48, %s49
    %p51 = scmp.eq.s32.totalorder %s50, 0
    %s53 = sadd.s32 %s52, 1
    %s54 = scalar_select %p51, %s52, %s53
    %p57 = pneg %p51
    %p58 = scmp.eq.s32.totalorder %s28, 1
    %p59 = por %p57, %p58
    %p60 = scmp.ne.s32.totalorder %s52, %s55
    %p61 = scmp.eq.s32.totalorder %s28, 0
    %p62 = por %p60, %p61
    %p63 = scmp.ne.s32.totalorder %s52, %s55
    %p64 = scmp.eq.s32.totalorder %s33, 1
    %p65 = por %p63, %p64
    %p66 = scmp.ne.s32.totalorder %s55, %s56
    %p67 = scmp.eq.s32.totalorder %s33, 0
    %p68 = por %p66, %p67
    %p69 = scmp.ne.s32.totalorder %s55, %s56
    %p70 = scmp.eq.s32.totalorder %s34, 1
    %p71 = por %p69, %p70
    %p73 = scmp.ne.s32.totalorder %s56, %s72
    %p74 = scmp.eq.s32.totalorder %s34, 0
    %p75 = por %p73, %p74
    %s76 = ssub.s32 %s35, %s47
    %s77 = ssub.s32 %s36, %s43
    %s78 = sor.u32 %s76, %s77
    %p79 = scmp.eq.s32.totalorder %s78, 0
    %s81 = sadd.s32 %s80, 1
    %s82 = scalar_select %p79, %s80, %s81
    %p85 = pneg %p79
    %p86 = scmp.eq.s32.totalorder %s28, 1
    %p87 = por %p85, %p86
    %p88 = scmp.ne.s32.totalorder %s80, %s83
    %p89 = scmp.eq.s32.totalorder %s28, 0
    %p90 = por %p88, %p89
    %p91 = scmp.ne.s32.totalorder %s80, %s83
    %p92 = scmp.eq.s32.totalorder %s33, 1
    %p93 = por %p91, %p92
    %p94 = scmp.ne.s32.totalorder %s83, %s84
    %p95 = scmp.eq.s32.totalorder %s33, 0
    %p96 = por %p94, %p95
    %p97 = scmp.ne.s32.totalorder %s83, %s84
    %p98 = scmp.eq.s32.totalorder %s34, 1
    %p99 = por %p97, %p98
    %p101 = scmp.ne.s32.totalorder %s84, %s100
    %p102 = scmp.eq.s32.totalorder %s34, 0
    %p103 = por %p101, %p102
    %p104 = scmp.le.s32.totalorder 1, %s28
    %p105 = scmp.lt.s32.totalorder %s28, 3
    %p106 = pnand %p104, %p105
    %p107 = pneg %p106
    // Predicated region
    $region9: #{wrapped_model_forward.1} parent=5 // pred_check
      _
    $region10: #{wrapped_model_forward.1} parent=5 // pred_check_branch
      %109 = sbr.rel (%p106) target = $region12
    $region11: #{wrapped_model_forward.1} parent=5 // pred_region
      %s110 = ssub.s32 %s28, 1
    $region12: #{wrapped_model_forward.1} parent=5 // pred_fallthru
      _
    %p111 = scmp.lt.s32.totalorder %s28, 2
    // Predicated region
    $region13: #{wrapped_model_forward.1} parent=5 // pred_check
      %p112 = pneg %p111
    $region14: #{wrapped_model_forward.1} parent=5 // pred_check_branch
      %114 = sbr.rel (%p112) target = $region16
    $region15: #{wrapped_model_forward.1} parent=5 // pred_region
      // Predicated region
      $region17: #{wrapped_model_forward.1} parent=15 // pred_check
        %p115 = pneg %p62
      $region18: #{wrapped_model_forward.1} parent=15 // pred_check_branch
        %117 = sbr.rel (%p115) target = $region20
      $region19: #{wrapped_model_forward.1} parent=15 // pred_region
        %p118 = scmp.lt.s32.totalorder %s35, 1
        %s119 = scalar_select %p118, %s35, 1
        %p120 = scmp.lt.s32.totalorder %s36, 0
        %s121 = scalar_select %p120, %s36, 0
        %s122 = smul.addr %s119, 4
        %s123 = sadd.s32 %s121, %s122
        %s124 = smul.addr %s123, 2
        %s125 = scalar_lea.vmem %s3, %s124
      $region20: #{wrapped_model_forward.1} parent=15 // pred_fallthru
        _
    $region16: #{wrapped_model_forward.1} parent=5 // pred_fallthru
      _
    %p126 = scmp.le.s32.totalorder 1, %s28
    %p127 = scmp.lt.s32.totalorder %s28, 3
    %p128 = pnand %p126, %p127
    %p129 = pneg %p128
    // Predicated region
    $region21: #{wrapped_model_forward.1} parent=5 // pred_check
      _
    $region22: #{wrapped_model_forward.1} parent=5 // pred_check_branch
      %131 = sbr.rel (%p128) target = $region24
    $region23: #{wrapped_model_forward.1} parent=5 // pred_region
      %s132 = ssub.s32 %s28, 1
      %p133 = scmp.lt.s32.totalorder %s37, 1
      %s134 = scalar_select %p133, %s37, 1
      %p135 = scmp.lt.s32.totalorder %s38, 0
      %s136 = scalar_select %p135, %s38, 0
      %s137 = smul.addr %s134, 4
      %s138 = sadd.s32 %s136, %s137
      %s139 = smul.addr %s138, 2
      %s140 = scalar_lea.vmem %s3, %s139
      %p141 = pneg %p68
      %p142 = pneg %p65
      %p143 = pneg %p96
      %p144 = pneg %p93
      %p145 = scmp.lt.s32.totalorder %s37, 1
      %s146 = scalar_select %p145, %s37, 1
      %p147 = scmp.lt.s32.totalorder %s38, 0
      %s148 = scalar_select %p147, %s38, 0
      %s149 = smul.addr %s146, 4
      %s150 = sadd.s32 %s148, %s149
      %s151 = smul.addr %s150, 2
      %s152 = scalar_lea.vmem %s4, %s151
      %p153 = scmp.lt.s32.totalorder %s37, 1
      %s154 = scalar_select %p153, %s37, 1
      %p155 = scmp.lt.s32.totalorder %s38, 0
      %s156 = scalar_select %p155, %s38, 0
      %s157 = smul.addr %s154, 4
      %s158 = sadd.s32 %s156, %s157
      %s159 = smul.addr %s158, 2
      %s160 = scalar_lea.vmem %s3, %s159
      %p161 = scmp.lt.s32.totalorder %s37, 1
      %s162 = scalar_select %p161, %s37, 1
      %p163 = scmp.lt.s32.totalorder %s38, 0
      %s164 = scalar_select %p163, %s38, 0
      %s165 = smul.addr %s162, 4
      %s166 = sadd.s32 %s164, %s165
      %s167 = smul.addr %s166, 2
      %s168 = scalar_lea.vmem %s4, %s167
      %v169 = vld [vmem:[%s160] sm:$0x3]
      %s170 = smul.u32 %s37, 4
      %s171 = sld [smem:[#allocation3 + %s170]]
      %v172 = vstv %s171
      %v173 = vadd.f32 %v169, %v172
      %s174 = scalar_lea.vmem %s160, 2
      %v175 = vld [vmem:[%s174] sm:$0x3]
      %s176 = sadd.s32 %s170, 1
      %s177 = sld [smem:[#allocation3 + %s176]]
      %v178 = vstv %s177
      %v179 = vadd.f32 %v175, %v178
      %s180 = scalar_lea.vmem %s160, 4
      %v181 = vld [vmem:[%s180] sm:$0x3]
      %s182 = sadd.s32 %s170, 2
      %s183 = sld [smem:[#allocation3 + %s182]]
      %v184 = vstv %s183
      %v185 = vadd.f32 %v181, %v184
      %s186 = scalar_lea.vmem %s160, 6
      %v187 = vld [vmem:[%s186] sm:$0x3]
      %s188 = sadd.s32 %s170, 3
      %s189 = sld [smem:[#allocation3 + %s188]]
      %v190 = vstv %s189
      %v191 = vadd.f32 %v187, %v190
      %s192 = sld [smem:[#allocation4]]
      %v193 = vstv %s192
      %v194 = vmul.f32 %v173, %v193
      %s195 = sld [smem:[#allocation4 + $0x4]]
      %v196 = vstv %s195
      %v197 = vmul.f32 %v179, %v196
      %v198 = vadd.f32 %v194, %v197
      %s199 = sld [smem:[#allocation4 + $0x8]]
      %v200 = vstv %s199
      %v201 = vmul.f32 %v185, %v200
      %v202 = vadd.f32 %v198, %v201
      %s203 = sld [smem:[#allocation4 + $0xc]]
      %v204 = vstv %s203
      %v205 = vmul.f32 %v191, %v204
      %v206 = vadd.f32 %v202, %v205
      %s207 = sld [smem:[#allocation5]]
      %v208 = vstv %s207
      %v209 = vadd.f32 %v206, %v208
      %v210 = vxor.u32 %v209, 2147483648
      %v211 = vmul.f32 %v210, 1.442695
      %v212 = vpow.pop %v211
      %v213 = vadd.f32 %v212, 1.0
      %v214 = vrcp.pop %v213
      %v215 = vmul.f32 %v213, %v214
      %v216 = vsub.f32 1.0, %v215
      %v217 = vmul.f32 %v214, %v216
      %v218 = vadd.f32 %v214, %v217
      %vm219 = vweird.f32 %v213
      %vm220 = vweird.f32 %v214
      %vm221 = vmor %vm219, %vm220
      %v222 = vsel %vm221, %v214, %v218
      %v223 = vand.u32 2147483647, %v213
      %vm224 = vcmp.eq.f32.partialorder %v223, 8.507059e+37
      %v225 = vand.u32 %v213, 2147483648
      %v226 = vor.u32 1.1754944e-38, %v225
      %v227 = vsel %vm224, %v226, %v222
      %v228 = vmul.f32 1.0, %v227
      %v229 = vmul.f32 %v209, %v228
      %230 = vst [vmem:[%s168] sm:$0x3] %v229
      %s231 = sld [smem:[#allocation4 + $0x1]]
      %v232 = vstv %s231
      %v233 = vmul.f32 %v173, %v232
      %s234 = sld [smem:[#allocation4 + $0x5]]
      %v235 = vstv %s234
      %v236 = vmul.f32 %v179, %v235
      %v237 = vadd.f32 %v233, %v236
      %s238 = sld [smem:[#allocation4 + $0x9]]
      %v239 = vstv %s238
      %v240 = vmul.f32 %v185, %v239
      %v241 = vadd.f32 %v237, %v240
      %s242 = sld [smem:[#allocation4 + $0xd]]
      %v243 = vstv %s242
      %v244 = vmul.f32 %v191, %v243
      %v245 = vadd.f32 %v241, %v244
      %s246 = sld [smem:[#allocation5 + $0x1]]
      %v247 = vstv %s246
      %v248 = vadd.f32 %v245, %v247
      %v249 = vxor.u32 %v248, 2147483648
      %v250 = vmul.f32 %v249, 1.442695
      %v251 = vpow.pop %v250
      %v252 = vadd.f32 %v251, 1.0
      %v253 = vrcp.pop %v252
      %v254 = vmul.f32 %v252, %v253
      %v255 = vsub.f32 1.0, %v254
      %v256 = vmul.f32 %v253, %v255
      %v257 = vadd.f32 %v253, %v256
      %vm258 = vweird.f32 %v252
      %vm259 = vweird.f32 %v253
      %vm260 = vmor %vm258, %vm259
      %v261 = vsel %vm260, %v253, %v257
      %v262 = vand.u32 2147483647, %v252
      %vm263 = vcmp.eq.f32.partialorder %v262, 8.507059e+37
      %v264 = vand.u32 %v252, 2147483648
      %v265 = vor.u32 1.1754944e-38, %v264
      %v266 = vsel %vm263, %v265, %v261
      %v267 = vmul.f32 1.0, %v266
      %v268 = vmul.f32 %v248, %v267
      %s269 = scalar_lea.vmem %s168, 2
      %270 = vst [vmem:[%s269] sm:$0x3] %v268
      %s271 = sld [smem:[#allocation4 + $0x2]]
      %v272 = vstv %s271
      %v273 = vmul.f32 %v173, %v272
      %s274 = sld [smem:[#allocation4 + $0x6]]
      %v275 = vstv %s274
      %v276 = vmul.f32 %v179, %v275
      %v277 = vadd.f32 %v273, %v276
      %s278 = sld [smem:[#allocation4 + $0xa]]
      %v279 = vstv %s278
      %v280 = vmul.f32 %v185, %v279
      %v281 = vadd.f32 %v277, %v280
      %s282 = sld [smem:[#allocation4 + $0xe]]
      %v283 = vstv %s282
      %v284 = vmul.f32 %v191, %v283
      %v285 = vadd.f32 %v281, %v284
      %s286 = sld [smem:[#allocation5 + $0x2]]
      %v287 = vstv %s286
      %v288 = vadd.f32 %v285, %v287
      %v289 = vxor.u32 %v288, 2147483648
      %v290 = vmul.f32 %v289, 1.442695
      %v291 = vpow.pop %v290
      %v292 = vadd.f32 %v291, 1.0
      %v293 = vrcp.pop %v292
      %v294 = vmul.f32 %v292, %v293
      %v295 = vsub.f32 1.0, %v294
      %v296 = vmul.f32 %v293, %v295
      %v297 = vadd.f32 %v293, %v296
      %vm298 = vweird.f32 %v292
      %vm299 = vweird.f32 %v293
      %vm300 = vmor %vm298, %vm299
      %v301 = vsel %vm300, %v293, %v297
      %v302 = vand.u32 2147483647, %v292
      %vm303 = vcmp.eq.f32.partialorder %v302, 8.507059e+37
      %v304 = vand.u32 %v292, 2147483648
      %v305 = vor.u32 1.1754944e-38, %v304
      %v306 = vsel %vm303, %v305, %v301
      %v307 = vmul.f32 1.0, %v306
      %v308 = vmul.f32 %v288, %v307
      %s309 = scalar_lea.vmem %s168, 4
      %310 = vst [vmem:[%s309] sm:$0x3] %v308
      %s311 = sld [smem:[#allocation4 + $0x3]]
      %v312 = vstv %s311
      %v313 = vmul.f32 %v173, %v312
      %s314 = sld [smem:[#allocation4 + $0x7]]
      %v315 = vstv %s314
      %v316 = vmul.f32 %v179, %v315
      %v317 = vadd.f32 %v313, %v316
      %s318 = sld [smem:[#allocation4 + $0xb]]
      %v319 = vstv %s318
      %v320 = vmul.f32 %v185, %v319
      %v321 = vadd.f32 %v317, %v320
      %s322 = sld [smem:[#allocation4 + $0xf]]
      %v323 = vstv %s322
      %v324 = vmul.f32 %v191, %v323
      %v325 = vadd.f32 %v321, %v324
      %s326 = sld [smem:[#allocation5 + $0x3]]
      %v327 = vstv %s326
      %v328 = vadd.f32 %v325, %v327
      %v329 = vxor.u32 %v328, 2147483648
      %v330 = vmul.f32 %v329, 1.442695
      %v331 = vpow.pop %v330
      %v332 = vadd.f32 %v331, 1.0
      %v333 = vrcp.pop %v332
      %v334 = vmul.f32 %v332, %v333
      %v335 = vsub.f32 1.0, %v334
      %v336 = vmul.f32 %v333, %v335
      %v337 = vadd.f32 %v333, %v336
      %vm338 = vweird.f32 %v332
      %vm339 = vweird.f32 %v333
      %vm340 = vmor %vm338, %vm339
      %v341 = vsel %vm340, %v333, %v337
      %v342 = vand.u32 2147483647, %v332
      %vm343 = vcmp.eq.f32.partialorder %v342, 8.507059e+37
      %v344 = vand.u32 %v332, 2147483648
      %v345 = vor.u32 1.1754944e-38, %v344
      %v346 = vsel %vm343, %v345, %v341
      %v347 = vmul.f32 1.0, %v346
      %v348 = vmul.f32 %v328, %v347
      %s349 = scalar_lea.vmem %s168, 6
      %350 = vst [vmem:[%s349] sm:$0x3] %v348
      %p351 = scmp.lt.s32.totalorder %s37, 1
      %s352 = scalar_select %p351, %s37, 1
      %p353 = scmp.lt.s32.totalorder %s38, 0
      %s354 = scalar_select %p353, %s38, 0
      %s355 = smul.addr %s352, 4
      %s356 = sadd.s32 %s354, %s355
      %s357 = smul.addr %s356, 2
      %s358 = scalar_lea.vmem %s4, %s357
      // Predicated region
      $region25: #{wrapped_model_forward.1} parent=23 // pred_check
        %p359 = pneg %p93
      $region26: #{wrapped_model_forward.1} parent=23 // pred_check_branch
        %361 = sbr.rel (%p359) target = $region28
      $region27: #{wrapped_model_forward.1} parent=23 // pred_region
        _
      $region28: #{wrapped_model_forward.1} parent=23 // pred_fallthru
        _
    $region24: #{wrapped_model_forward.1} parent=5 // pred_fallthru
      _
    %p362 = scmp.le.s32.totalorder 2, %s28
    // Predicated region
    $region29: #{wrapped_model_forward.1} parent=5 // pred_check
      %p363 = pneg %p362
    $region30: #{wrapped_model_forward.1} parent=5 // pred_check_branch
      %365 = sbr.rel (%p363) target = $region32
    $region31: #{wrapped_model_forward.1} parent=5 // pred_region
      %s366 = ssub.s32 %s28, 2
      // Predicated region
      $region33: #{wrapped_model_forward.1} parent=31 // pred_check
        %p367 = pneg %p99
      $region34: #{wrapped_model_forward.1} parent=31 // pred_check_branch
        %369 = sbr.rel (%p367) target = $region36
      $region35: #{wrapped_model_forward.1} parent=31 // pred_region
        %p370 = scmp.lt.s32.totalorder %s39, 1
        %s371 = scalar_select %p370, %s39, 1
        %p372 = scmp.lt.s32.totalorder %s40, 0
        %s373 = scalar_select %p372, %s40, 0
        %s374 = smul.addr %s371, 4
        %s375 = sadd.s32 %s373, %s374
        %s376 = smul.addr %s375, 2
        %s377 = scalar_lea.vmem %s4, %s376
      $region36: #{wrapped_model_forward.1} parent=31 // pred_fallthru
        _
    $region32: #{wrapped_model_forward.1} parent=5 // pred_fallthru
      _
  $region6: #{wrapped_model_forward.1} parent=0 // loop_footer
    %s32 = sadd.s32 1, %s28
  $region7: #{wrapped_model_forward.1} parent=0 // loop_footer_branch
    %27 = sbr.rel target = $region3
  $region8: #{wrapped_model_forward.1} parent=0 // loop_exit
    _

</llo_original>
